<compile_context>
chip_gen: v7x
topology: tpu7x:2x2x1
jax: 0.10.0
libtpu: 0.0.40
codegen_flags: <defaults>
</compile_context>

<pallas_src>
import functools

import jax
import jax.numpy as jnp
from jax import lax
from jax.experimental import pallas as pl
from jax.experimental.pallas import tpu as pltpu


def _round_up(x, m):
    return (x + m - 1) // m * m


def _cdiv(a, b):
    return -(-a // b)


def _segment_max_kernel(seg_ref, lo_ref, hi_ref, h_ref, o_ref, *, node_tile):
    """One (feature-chunk, node-tile) grid step of segment max pooling.

    seg_ref : SMEM (b_pad + 1,) int32     -- row offset of each graph segment
    lo_ref  : SMEM (num_node_tiles,) i32  -- first graph id present per tile
    hi_ref  : SMEM (num_node_tiles,) i32  -- last  graph id present per tile
    h_ref   : VMEM (node_tile, feat_chunk)     -- node-feature tile (input dtype)
    o_ref   : VMEM (b_pad, feat_chunk) f32     -- resident running-max accumulator
    """
    t = pl.program_id(1)  # node-tile (reduction) axis

    @pl.when(t == 0)
    def _init():
        o_ref[...] = jnp.full_like(o_ref, -jnp.inf)

    h = h_ref[...]                                              # (TN, DC), native dtype
    base = t * node_tile
    row = lax.broadcasted_iota(jnp.int32, (node_tile, 1), 0)    # (TN, 1)

    lo = lo_ref[t]
    hi = hi_ref[t]

    def body(b, carry):
        # Rows of graph `b` inside this tile (sorted batch => contiguous range).
        s = jnp.maximum(seg_ref[b] - base, 0)
        e = jnp.minimum(seg_ref[b + 1] - base, node_tile)
        mask = (row >= s) & (row < e)                           # (TN, 1)
        tile_max = jnp.max(jnp.where(mask, h, -jnp.inf), axis=0, keepdims=True)
        tile_max = tile_max.astype(jnp.float32)                 # (1, DC)
        o_ref[pl.ds(b, 1), :] = jnp.maximum(o_ref[pl.ds(b, 1), :], tile_max)
        return carry

    # Only the graphs actually present in this tile (typically 1-2 for big tiles).
    lax.fori_loop(lo, hi + 1, body, 0)


def adaptive_max_averaging(h, indices, batch, num_graphs, emb_dim, *,
                           node_tile=1024, feat_chunk=512):
    """JAX/Pallas equivalent of AdaptiveMaxAveraging.forward(h, indices, batch)."""
    h = h.reshape(-1, emb_dim)
    in_dtype = h.dtype
    indices = indices.astype(jnp.int32)
    batch = batch.astype(jnp.int32)
    m = int(indices.shape[0])

    # Sort selected rows by graph id so each graph is a contiguous row range.
    # (Only index arrays are permuted; the permutation composes with the gather.)
    order = jnp.argsort(batch)
    batch_sorted = batch[order]
    gather_idx = indices[order]

    # index_select (row gather) -- plain-JAX glue.
    # TODO(synk): fuse the arbitrary-row gather into the kernel via manual
    # per-row DMA (memory_space=pl.ANY + make_async_copy) to avoid materializing
    # valid_h in HBM.
    valid_h = jnp.take(h, gather_idx, axis=0)                   # (M, emb_dim)

    # ---- tiling / padding --------------------------------------------------
    # Choose the tile size so row padding waste is <= 7 rows per tile.
    num_tiles = max(1, _cdiv(m, node_tile))
    tn = _round_up(max(_cdiv(m, num_tiles), 1), 8)
    m_pad = tn * num_tiles

    d_pad = _round_up(emb_dim, 128)                             # lane-dense output
    dc = d_pad
    if dc > feat_chunk:
        cand = (feat_chunk // 128) * 128
        while cand >= 128:
            if d_pad % cand == 0:
                dc = cand
                break
            cand -= 128
    num_chunks = d_pad // dc

    b_pad = _round_up(max(num_graphs, 1), 8)                    # sublane-aligned acc

    # Pad rows (masked out in-kernel) and feature columns (sliced off after).
    h_pad = jnp.pad(valid_h, ((0, m_pad - m), (0, d_pad - emb_dim)))

    # Per-graph segment row offsets (batch_sorted is sorted; seg[num_graphs:] == M,
    # so padded graphs are empty segments and are never touched by the kernel).
    seg_starts = jnp.searchsorted(
        batch_sorted, jnp.arange(b_pad + 1, dtype=jnp.int32)
    ).astype(jnp.int32)

    # Per-node-tile [first, last] graph id present.
    if m_pad > m:
        batch_pad = jnp.concatenate(
            [batch_sorted,
             jnp.full((m_pad - m,), batch_sorted[m - 1], dtype=jnp.int32)])
    else:
        batch_pad = batch_sorted
    tiles = batch_pad.reshape(num_tiles, tn)
    tile_lo = tiles[:, 0].astype(jnp.int32)
    tile_hi = tiles[:, -1].astype(jnp.int32)

    kernel = functools.partial(_segment_max_kernel, node_tile=tn)

    out = pl.pallas_call(
        kernel,
        out_shape=jax.ShapeDtypeStruct((b_pad, d_pad), jnp.float32),
        grid_spec=pltpu.PrefetchScalarGridSpec(
            num_scalar_prefetch=3,
            grid=(num_chunks, num_tiles),  # (parallel feature axis, node axis last)
            in_specs=[
                pl.BlockSpec((tn, dc), lambda j, i, seg, lo, hi: (i, j)),
            ],
            out_specs=pl.BlockSpec((b_pad, dc),
                                   lambda j, i, seg, lo, hi: (0, j)),
        ),
        compiler_params=pltpu.CompilerParams(
            dimension_semantics=("parallel", "arbitrary"),
        ),
    )(seg_starts, tile_lo, tile_hi, h_pad)

    # Empty graphs stay at -inf, matching jax.ops.segment_max semantics.
    return out[:num_graphs, :emb_dim].astype(in_dtype)


if __name__ == "__main__":
    key = jax.random.PRNGKey(0)
    k_h, k_idx, k_b, k_h2, k_idx2, k_b2 = jax.random.split(key, 6)

    # ---- test 1: small, single-tile, single-chunk --------------------------
    emb_dim = 32
    n_total = 80          # total node rows in h
    m = 48                # number of selected ("valid") nodes
    num_graphs = 4        # 12 selected nodes per graph

    h = jax.random.normal(k_h, (n_total, emb_dim), dtype=jnp.float32)
    indices = jax.random.permutation(k_idx, n_total)[:m].astype(jnp.int32)
    batch = jax.random.permutation(
        k_b, jnp.repeat(jnp.arange(num_graphs, dtype=jnp.int32),
                        m // num_graphs))

    out = adaptive_max_averaging(h, indices, batch, num_graphs, emb_dim)
    out = jax.block_until_ready(out)

    valid_h = jnp.take(h, indices, axis=0)
    ref = jax.ops.segment_max(valid_h, batch, num_segments=num_graphs)
    assert out.shape == (num_graphs, emb_dim)
    assert jnp.allclose(out, ref, atol=1e-6, rtol=1e-6)

    # ---- test 2: multi-tile (node axis) and multi-chunk (feature axis) -----
    emb_dim2 = 160
    n_total2 = 400
    m2 = 300
    num_graphs2 = 5

    h2 = jax.random.normal(k_h2, (n_total2, emb_dim2), dtype=jnp.float32)
    indices2 = jax.random.permutation(k_idx2, n_total2)[:m2].astype(jnp.int32)
    batch2 = jax.random.permutation(
        k_b2, jnp.repeat(jnp.arange(num_graphs2, dtype=jnp.int32),
                         m2 // num_graphs2))

    out2 = adaptive_max_averaging(h2, indices2, batch2, num_graphs2, emb_dim2,
                                  node_tile=128, feat_chunk=128)
    out2 = jax.block_until_ready(out2)

    valid_h2 = jnp.take(h2, indices2, axis=0)
    ref2 = jax.ops.segment_max(valid_h2, batch2, num_segments=num_graphs2)
    assert out2.shape == (num_graphs2, emb_dim2)
    assert jnp.allclose(out2, ref2, atol=1e-6, rtol=1e-6)

    print("KERNEL_OK")
</pallas_src>

<mosaic_0001>
module attributes {stable_mosaic.version = 11 : i64} {
  func.func @_segment_max_kernel(%arg0: i32, %arg1: i32, %arg2: memref<9xi32, #tpu.memory_space<smem>>, %arg3: memref<1xi32, #tpu.memory_space<smem>>, %arg4: memref<1xi32, #tpu.memory_space<smem>>, %arg5: memref<48x128xf32, #tpu.memory_space<vmem>>, %arg6: memref<8x128xf32, #tpu.memory_space<vmem>>) attributes {dimension_semantics = [#tpu.dimension_semantics<parallel>, #tpu.dimension_semantics<arbitrary>], iteration_bounds = array<i64: 1, 1>, scalar_prefetch = 3 : i64, scratch_operands = 0 : i64, tpu.core_type = #tpu.core_type<tc>, window_params = [{transform_indices = @transform_0, window_bounds = array<i64: 48, 128>}, {transform_indices = @transform_1, window_bounds = array<i64: 8, 128>}]} {
    %c0_i32 = arith.constant 0 : i32
    %0 = arith.cmpi eq, %arg1, %c0_i32 : i32
    %1 = arith.extui %0 : i1 to i32
    %c0_i32_0 = arith.constant 0 : i32
    %2 = arith.cmpi ne, %1, %c0_i32_0 : i32
    scf.if %2 {
      %cst = arith.constant 0xFF800000 : f32
      %13 = vector.broadcast %cst : f32 to vector<8x128xf32>
      %c0_4 = arith.constant 0 : index
      %c0_5 = arith.constant 0 : index
      %14 = vector.load %arg6[%c0_4, %c0_5] : memref<8x128xf32, #tpu.memory_space<vmem>>, vector<8x128xf32>
      tpu.vector_store %arg6[%c0_4, %c0_5], %13 {strides = array<i32>} : memref<8x128xf32, #tpu.memory_space<vmem>>, vector<8x128xf32>,
    } else {
    }
    %c0 = arith.constant 0 : index
    %c0_1 = arith.constant 0 : index
    %3 = vector.load %arg5[%c0, %c0_1] : memref<48x128xf32, #tpu.memory_space<vmem>>, vector<48x128xf32>
    %c48_i32 = arith.constant 48 : i32
    %4 = arith.muli %arg1, %c48_i32 : i32
    %5 = tpu.iota {dimensions = array<i32: 0>} : vector<48x1xi32>
    %6 = arith.index_cast %arg1 : i32 to index
    %7 = memref.load %arg3[%6] : memref<1xi32, #tpu.memory_space<smem>>
    %8 = arith.index_cast %arg1 : i32 to index
    %9 = memref.load %arg4[%8] : memref<1xi32, #tpu.memory_space<smem>>
    %c1_i32 = arith.constant 1 : i32
    %10 = arith.addi %9, %c1_i32 : i32
    %c0_i32_2 = arith.constant 0 : i32
    %11 = arith.subi %10, %7 : i32
    %12 = arith.addi %7, %11 : i32
    %c1_i32_3 = arith.constant 1 : i32
    scf.for %arg7 = %7 to %12 step %c1_i32_3  : i32 {
      %13 = arith.index_cast %arg7 : i32 to index
      %14 = memref.load %arg2[%13] : memref<9xi32, #tpu.memory_space<smem>>
      %15 = arith.subi %14, %4 : i32
      %c0_i32_4 = arith.constant 0 : i32
      %16 = arith.maxsi %15, %c0_i32_4 : i32
      %c1_i32_5 = arith.constant 1 : i32
      %17 = arith.addi %arg7, %c1_i32_5 : i32
      %18 = arith.index_cast %17 : i32 to index
      %19 = memref.load %arg2[%18] : memref<9xi32, #tpu.memory_space<smem>>
      %20 = arith.subi %19, %4 : i32
      %c48_i32_6 = arith.constant 48 : i32
      %21 = arith.minsi %20, %c48_i32_6 : i32
      %22 = vector.broadcast %16 : i32 to vector<48x1xi32>
      %23 = arith.cmpi sge, %5, %22 : vector<48x1xi32>
      %24 = vector.broadcast %21 : i32 to vector<48x1xi32>
      %25 = arith.cmpi slt, %5, %24 : vector<48x1xi32>
      %26 = arith.andi %23, %25 : vector<48x1xi1>
      %cst = arith.constant 0xFF800000 : f32
      %27 = vector.shape_cast %26 : vector<48x1xi1> to vector<48x1xi1>
      %28 = vector.broadcast %27 : vector<48x1xi1> to vector<48x128xi1>
      %29 = vector.broadcast %cst : f32 to vector<48x128xf32>
      %30 = arith.select %28, %3, %29 : vector<48x128xi1>, vector<48x128xf32>
      %cst_7 = arith.constant dense<0xFF800000> : vector<128xf32>
      %31 = vector.multi_reduction <maximumf>, %30, %cst_7 [0] : vector<48x128xf32> to vector<128xf32>
      %32 = vector.shape_cast %31 : vector<128xf32> to vector<1x128xf32>
      %33 = arith.index_cast %arg7 : i32 to index
      %c0_8 = arith.constant 0 : index
      %34 = vector.load %arg6[%33, %c0_8] : memref<8x128xf32, #tpu.memory_space<vmem>>, vector<1x128xf32>
      %35 = arith.maximumf %34, %32 : vector<1x128xf32>
      %36 = arith.index_cast %arg7 : i32 to index
      %c0_9 = arith.constant 0 : index
      %37 = vector.load %arg6[%36, %c0_9] : memref<8x128xf32, #tpu.memory_space<vmem>>, vector<1x128xf32>
      tpu.vector_store %arg6[%36, %c0_9], %35 {strides = array<i32>} : memref<8x128xf32, #tpu.memory_space<vmem>>, vector<1x128xf32>,
    }
    return
  }
  func.func @transform_0(%arg0: i32, %arg1: i32, %arg2: memref<9xi32, #tpu.memory_space<smem>>, %arg3: memref<1xi32, #tpu.memory_space<smem>>, %arg4: memref<1xi32, #tpu.memory_space<smem>>) -> (i32, i32) {
    %c0_i32 = arith.constant 0 : i32
    return %arg1, %arg0 : i32, i32
  }
  func.func @transform_1(%arg0: i32, %arg1: i32, %arg2: memref<9xi32, #tpu.memory_space<smem>>, %arg3: memref<1xi32, #tpu.memory_space<smem>>, %arg4: memref<1xi32, #tpu.memory_space<smem>>) -> (i32, i32) {
    %c0_i32 = arith.constant 0 : i32
    %c0_i32_0 = arith.constant 0 : i32
    return %c0_i32, %arg0 : i32, i32
  }
}

</mosaic_0001>

<llo_original>
// kernel: tpu_custom_call.1
$region0: #{tpu_custom_call.1}
  #allocation0 [shape = 'u32[]', space=smem, size = 0x4, offset = 0x4, fixed_abs, tag = 'smem constant byte address 0x4 - core index']
  #allocation1 [shape = 'u32[144,128]{1,0:T(1,128)}', space=vmem, size = 0x12000, scoped, tag = 'internal scratch']
  #allocation2 [shape = 's32[1]{0}', space=sflag, size = 0x4, scoped, tag = 'scoped memory for tpu_custom_call.1']
  #allocation3 [shape = 'u8[512]{0}', space=smem, size = 0x200, scoped, tag = 'prefetched SMEM operand 0']
  #allocation4 [shape = 's32[1]{0:T(128)S(6)}', space=smem, size = 0x200, scoped, tag = 'prefetched SMEM operand 1']
  #allocation5 [shape = 's32[1]{0:T(128)S(6)}', space=smem, size = 0x200, scoped, tag = 'prefetched SMEM operand 2']
  %s0 = inlined_call_operand.vmem [shape: s32[9], index: 0, kind: input, shape index: {}]
  %s1 = inlined_call_operand.<no memory space> [shape: s32[1], index: 1, kind: input, shape index: {}]
  %s2 = inlined_call_operand.<no memory space> [shape: s32[1], index: 2, kind: input, shape index: {}]
  %s3 = inlined_call_operand.hbm [shape: f32[48,128], index: 3, kind: input, shape index: {}]
  %s4 = inlined_call_operand.hbm [shape: f32[8,128], index: 4, kind: output, shape index: {}]
  %s5 = sld [smem:[#allocation0]]
  $region29: #{tpu_custom_call.1} parent=0
    _
  %s7 = ssub.s32 1, %s5
  %s8 = scalar_select 0, %s7, %s5
  %s9 = sshll.u32 %s0, 4
  %s10 = int_to_ptr.vmem [resolvable:$true] %s9
  %12 = dma.vmem_to_smem %s10, 16, [#allocation3], [#allocation2]
  %13 = sst [smem:[#allocation4]] %s1
  %14 = sst [smem:[#allocation5]] %s2
  %15 = dma.done [#allocation2], 16
  %16 = sfence
  $region1: #{tpu_custom_call.1} parent=0
    #allocation6 [shape = 'u8[24576]{0}', space=vmem, size = 0x6000, scoped, tag = 'input window, operand 3, single buffered']
    #allocation7 [shape = 's32[1]{0}', space=sflag, size = 0x4, scoped, tag = 'scoped memory for tpu_custom_call.1']
    #allocation8 [shape = 's32[1]{0}', space=sflag, size = 0x4, scoped, tag = 'scoped memory for tpu_custom_call.1']
    #allocation9 [shape = 'u8[4096]{0}', space=vmem, size = 0x1000, scoped, tag = 'output window, operand 0, single buffered']
    %17 = vsyncpa [#allocation7], 0
    %18 = vsyncpa [#allocation8], 0
    // Predicated region
    $region2: #{tpu_custom_call.1} parent=1 // pred_check
      _
    $region3: #{tpu_custom_call.1} parent=1 // pred_check_branch
      %20 = sbr.rel (0) target = $region5
    $region4: #{tpu_custom_call.1} parent=1 // pred_region
      %s22 = ssub.s32 768, 768
      %23 = vsyncadd [#allocation7], %s22
      %s24 = sshll.u32 [#allocation6], 4
      %s25 = int_to_ptr.vmem [resolvable:$true] %s24
      %30 = dma.hbm_to_vmem [thread:$0]  %s3, 768, %s25, [#allocation7], 128, 128, 8
    $region5: #{tpu_custom_call.1} parent=1 // pred_fallthru
      _
    // Predicated region
    $region6: #{tpu_custom_call.1} parent=1 // pred_check
      _
    $region7: #{tpu_custom_call.1} parent=1 // pred_check_branch
      %32 = sbr.rel (0) target = $region9
    $region8: #{tpu_custom_call.1} parent=1 // pred_region
      %33 = dma.done [#allocation7], 768
    $region9: #{tpu_custom_call.1} parent=1 // pred_fallthru
      _
    %p34 = scmp.eq.s32.totalorder 0, 0
    // Predicated region
    $region10: #{tpu_custom_call.1} parent=1 // pred_check
      %p35 = pneg %p34
    $region11: #{tpu_custom_call.1} parent=1 // pred_check_branch
      %37 = sbr.rel (%p35) target = $region13
    $region12: #{tpu_custom_call.1} parent=1 // pred_region
      %38 = vst [vmem:[#allocation9] sm:$0xff] -inf
    $region13: #{tpu_custom_call.1} parent=1 // pred_fallthru
      _
    %v39 = vld [vmem:[#allocation6] sm:$0xff]
    %v40 = vld [vmem:[#allocation6 + $0x8] sm:$0xff]
    %v41 = vld [vmem:[#allocation6 + $0x10] sm:$0xff]
    %v42 = vld [vmem:[#allocation6 + $0x18] sm:$0xff]
    %v43 = vld [vmem:[#allocation6 + $0x20] sm:$0xff]
    %v44 = vld [vmem:[#allocation6 + $0x28] sm:$0xff]
    %s45 = smul.u32 0, 48
    %v46 = vlaneseq
    %v47 = vshrl.u32 %v46, 7
    %v48 = vadd.s32 %v47, 8
    %v49 = vadd.s32 %v47, 16
    %v50 = vadd.s32 %v47, 24
    %v51 = vadd.s32 %v47, 32
    %v52 = vadd.s32 %v47, 40
    %s53 = sld [smem:[#allocation4]]
    %s54 = sld [smem:[#allocation5]]
    %s55 = sadd.s32 %s54, 1
    // While loop
    $region14: #{tpu_custom_call.1} parent=1 // loop_pre_header
      _
    $region15: #{tpu_custom_call.1} parent=1 // loop_header
      %s57 = sphi %s53, %s59
      %p58 = scmp.ge.s32.totalorder %s57, %s55
    $region16: #{tpu_custom_call.1} parent=1 // loop_header_branch
      %61 = sbr.rel (%p58) target = $region20
    $region17: #{tpu_custom_call.1} parent=1 // loop_body
      %s62 = sld [smem:[#allocation3 + %s57]]
      %s63 = ssub.s32 %s62, %s45
      %p64 = scmp.gt.s32.totalorder %s63, 0
      %s65 = scalar_select %p64, %s63, 0
      %s66 = sadd.s32 %s57, 1
      %s67 = sld [smem:[#allocation3 + %s66]]
      %s68 = ssub.s32 %s67, %s45
      %p69 = scmp.lt.s32.totalorder %s68, 48
      %s70 = scalar_select %p69, %s68, 48
      %v71 = vstv %s65
      %vm72 = vcmp.ge.s32.totalorder %v47, %v71
      %vm73 = vcmp.ge.s32.totalorder %v48, %v71
      %vm74 = vcmp.ge.s32.totalorder %v49, %v71
      %vm75 = vcmp.ge.s32.totalorder %v50, %v71
      %vm76 = vcmp.ge.s32.totalorder %v51, %v71
      %vm77 = vcmp.ge.s32.totalorder %v52, %v71
      %v78 = vstv %s70
      %vm79 = vcmp.lt.s32.totalorder %v47, %v78
      %vm80 = vcmp.lt.s32.totalorder %v48, %v78
      %vm81 = vcmp.lt.s32.totalorder %v49, %v78
      %vm82 = vcmp.lt.s32.totalorder %v50, %v78
      %vm83 = vcmp.lt.s32.totalorder %v51, %v78
      %vm84 = vcmp.lt.s32.totalorder %v52, %v78
      %vm85 = vmand %vm72, %vm79
      %vm86 = vmand %vm73, %vm80
      %vm87 = vmand %vm74, %vm81
      %vm88 = vmand %vm75, %vm82
      %vm89 = vmand %vm76, %vm83
      %vm90 = vmand %vm77, %vm84
      %v91 = vsel %vm85, 1, 0
      %v92 = vsel %vm86, 1, 0
      %v93 = vsel %vm87, 1, 0
      %v94 = vsel %vm88, 1, 0
      %v95 = vsel %vm89, 1, 0
      %v96 = vsel %vm90, 1, 0
      %vm97 = vcmp.eq.s32.totalorder %v91, 1
      %vm98 = vcmp.eq.s32.totalorder %v92, 1
      %vm99 = vcmp.eq.s32.totalorder %v93, 1
      %vm100 = vcmp.eq.s32.totalorder %v94, 1
      %vm101 = vcmp.eq.s32.totalorder %v95, 1
      %vm102 = vcmp.eq.s32.totalorder %v96, 1
      %v103 = vsel %vm97, %v39, -inf
      %v104 = vsel %vm98, %v40, -inf
      %v105 = vsel %vm99, %v41, -inf
      %v106 = vsel %vm100, %v42, -inf
      %v107 = vsel %vm101, %v43, -inf
      %v108 = vsel %vm102, %v44, -inf
      %v109 = vmax.f32 %v103, %v107
      %v110 = vmax.f32 %v104, %v108
      %v111 = vmax.f32 %v109, %v110
      %v112 = vmax.f32 %v105, %v106
      %v113 = vmax.f32 %v111, %v112
      %v114 = vrot.slane %v113, 4
      %v115 = vmax.f32 %v113, %v114
      %v116 = vrot.slane %v115, 2
      %v117 = vmax.f32 %v115, %v116
      %v118 = vrot.slane %v117, 1
      %v119 = vmax.f32 %v117, %v118
      %s120 = scalar_lea.vmem [#allocation9], %s57
      %v121 = vld [vmem:[%s120] sm:$0x1]
      %v122 = vmax.f32 %v121, %v119
      %123 = vst [vmem:[%s120] sm:$0x1] %v122
    $region18: #{tpu_custom_call.1} parent=1 // loop_footer
      %s59 = sadd.s32 %s57, 1
    $region19: #{tpu_custom_call.1} parent=1 // loop_footer_branch
      %56 = sbr.rel target = $region15
    $region20: #{tpu_custom_call.1} parent=1 // loop_exit
      _
    // Predicated region
    $region21: #{tpu_custom_call.1} parent=1 // pred_check
      _
    $region22: #{tpu_custom_call.1} parent=1 // pred_check_branch
      %125 = sbr.rel (0) target = $region24
    $region23: #{tpu_custom_call.1} parent=1 // pred_region
      %s127 = ssub.s32 128, 128
      %128 = vsyncadd [#allocation8], %s127
      %s130 = sshll.u32 [#allocation9], 4
      %s131 = int_to_ptr.vmem [resolvable:$true] %s130
      %133 = dma.vmem_to_hbm [thread:$0]  %s131, 128, %s4, [#allocation8]
    $region24: #{tpu_custom_call.1} parent=1 // pred_fallthru
      _
    // Predicated region
    $region25: #{tpu_custom_call.1} parent=1 // pred_check
      _
    $region26: #{tpu_custom_call.1} parent=1 // pred_check_branch
      %135 = sbr.rel (0) target = $region28
    $region27: #{tpu_custom_call.1} parent=1 // pred_region
      %136 = dma.done [#allocation8], 128
    $region28: #{tpu_custom_call.1} parent=1 // pred_fallthru
      _
    %137 = vsyncpa [#allocation7], 1
    %138 = vsyncpa [#allocation8], 1

</llo_original>
